<compile_context>
chip_gen: v5e
topology: v5e:2x2
jax: 0.10.0
libtpu: 0.0.40
codegen_flags: <defaults>
</compile_context>

<pallas_src>
import jax
import jax.numpy as jnp
from jax.experimental import pallas as pl
from jax.experimental.pallas import tpu as pltpu

_POOL_K = 5
_PAD = _POOL_K // 2
_VMEM_LIMIT = 40 * 1024 * 1024   # < v7x 64 MiB physical, comfortable on 128 MiB parts
_VMEM_BUDGET = 24 * 1024 * 1024  # per-step footprint target used by tile selection


def _pick_tm(m):
    """Largest convenient row tile that divides m exactly (no padded copies)."""
    tm = m
    for cand in (1024, 512, 256, 128, 64, 32, 16, 8):
        if m % cand == 0:
            tm = cand
            break
    # v7x has 2 TensorCores: make sure the parallel grid has >= 2 steps.
    if m // tm < 2 and tm >= 256 and tm % 2 == 0:
        tm //= 2
    return tm


def _pool_compute_dtype():
    """bf16 pool math on v6e/v7x (exact for max, half the ld/st bytes); f32 on
    v5e whose VPU has no native bf16."""
    try:
        kind = jax.devices()[0].device_kind.lower()
    except Exception:
        return jnp.bfloat16
    if "v5 lite" in kind or "v5lite" in kind or "v5e" in kind:
        return jnp.float32
    return jnp.bfloat16


# ----------------------------------------------------------------------------
# Kernel 1: cv1 = 1x1 conv (matmul) + folded-BN bias + SiLU.
# Weights/bias are untiled on Cout (resident in VMEM); only M is tiled.
# ----------------------------------------------------------------------------
def _conv1x1_silu_kernel(x_ref, w_ref, b_ref, o_ref):
    acc = jnp.dot(x_ref[...], w_ref[...], preferred_element_type=jnp.float32)
    acc = acc + b_ref[...]
    o_ref[...] = (acc * jax.nn.sigmoid(acc)).astype(o_ref.dtype)  # SiLU


def conv1x1_silu(x2d, w, b, out_dtype=jnp.bfloat16):
    """x2d: (M, K) bf16;  w: (K, Cout) bf16;  b: (1, Cout) f32 -> (M, Cout)."""
    M, K = x2d.shape
    Cout = w.shape[1]
    tm = _pick_tm(M)
    return pl.pallas_call(
        _conv1x1_silu_kernel,
        out_shape=jax.ShapeDtypeStruct((M, Cout), out_dtype),
        grid=(M // tm,),
        in_specs=[pl.BlockSpec((tm, K), lambda i: (i, 0)),
                  pl.BlockSpec((K, Cout), lambda i: (0, 0)),
                  pl.BlockSpec((1, Cout), lambda i: (0, 0))],
        out_specs=pl.BlockSpec((tm, Cout), lambda i: (i, 0)),
        compiler_params=pltpu.CompilerParams(
            dimension_semantics=("parallel",),
            vmem_limit_bytes=_VMEM_LIMIT),
    )(x2d, w, b)


# ----------------------------------------------------------------------------
# Kernel 2: fused cascaded 5x5 max pools + cv2 (1x1 conv + bias + SiLU).
# Grid = (N, c2_tiles, c__tiles); the c_ axis is the reduction ("arbitrary").
# o1/o2/o3 never leave VMEM; the SPPF concat is implicit in the 4 partial dots.
# ----------------------------------------------------------------------------
def _sppf_pool_cv2_kernel(x_ref, wa_ref, wb_ref, wc_ref, wd_ref, b_ref, o_ref,
                          pad_ref, acc_ref):
    # x_ref: (1, H, W, ct) bf16;  w*_ref: (ct, tn) bf16;  b_ref: (1, tn) f32
    # o_ref: (1, H, W, tn);  pad_ref: (1, H+2P, W+2P, ct) pool dtype scratch
    # acc_ref: (H*W, tn) f32 accumulator scratch (resident across the c axis)
    H, W, ct = x_ref.shape[1], x_ref.shape[2], x_ref.shape[3]
    P = _PAD
    c = pl.program_id(2)
    n_c = pl.num_programs(2)

    @pl.when(c == 0)
    def _init():
        acc_ref[...] = jnp.zeros_like(acc_ref)
        # Only the -inf border strips; the interior is overwritten every stage
        # and the border is never touched again within this reduction chain.
        pad_ref[:, 0:P, :, :] = jnp.full((1, P, W + 2 * P, ct), -jnp.inf, pad_ref.dtype)
        pad_ref[:, P + H:, :, :] = jnp.full((1, P, W + 2 * P, ct), -jnp.inf, pad_ref.dtype)
        pad_ref[:, :, 0:P, :] = jnp.full((1, H + 2 * P, P, ct), -jnp.inf, pad_ref.dtype)
        pad_ref[:, :, P + W:, :] = jnp.full((1, H + 2 * P, P, ct), -jnp.inf, pad_ref.dtype)

    def accumulate(v2d_bf16, w_ref):
        acc_ref[...] += jnp.dot(v2d_bf16, w_ref[...],
                                preferred_element_type=jnp.float32)

    x = x_ref[...]                                        # (1, H, W, ct) bf16
    accumulate(x.reshape(H * W, ct), wa_ref)

    cur = x.astype(pad_ref.dtype)
    for w_ref in (wb_ref, wc_ref, wd_ref):                # cascaded pools
        pad_ref[:, P:P + H, P:P + W, :] = cur
        # Separable 5x5 window max: W pass (reads sliced off the scratch ref
        # to keep vreg pressure low), then cheap H pass.
        rowm = pad_ref[:, :, 0:W, :]
        for dw in range(1, _POOL_K):
            rowm = jnp.maximum(rowm, pad_ref[:, :, dw:dw + W, :])
        pooled = rowm[:, 0:H, :, :]
        for dh in range(1, _POOL_K):
            pooled = jnp.maximum(pooled, rowm[:, dh:dh + H, :, :])
        accumulate(pooled.astype(jnp.bfloat16).reshape(H * W, ct), w_ref)
        cur = pooled                                       # next pool's input

    @pl.when(c == n_c - 1)
    def _finalize():
        acc = acc_ref[...] + b_ref[...]
        y = acc * jax.nn.sigmoid(acc)                      # SiLU (f32)
        o_ref[...] = y.reshape(1, H, W, o_ref.shape[3]).astype(o_ref.dtype)


def _fused_tiles(H, W, c_, c2, out_bytes, pool_bytes):
    """Pick (ct, tn): full channels by default (weights resident, lane-dense),
    halved while the estimated per-step VMEM footprint exceeds the budget."""
    hw = H * W

    def est(ct, tn):
        return (2 * hw * ct * 2                                   # x1 block (dbl-buffered)
                + 2 * 4 * ct * tn * 2                             # 4 weight blocks (dbl)
                + 2 * hw * tn * out_bytes                         # output block (dbl)
                + (H + 2 * _PAD) * (W + 2 * _PAD) * ct * pool_bytes   # pad scratch
                + hw * tn * 4)                                    # f32 accumulator

    ct, tn = c_, c2
    while est(ct, tn) > _VMEM_BUDGET and ct % 256 == 0:   # keep ct a 128-multiple
        ct //= 2
    while est(ct, tn) > _VMEM_BUDGET and tn % 256 == 0:   # keep tn a 128-multiple
        tn //= 2
    # TODO(synk): add a halo-tiled spatial (H) path for very large H*W on v7x
    # (64 MiB VMEM); current fallback only shrinks the channel tiles.
    return ct, tn


def sppf_pool_cv2(x1_nhwc, w2, b2, out_dtype=jnp.bfloat16):
    """x1_nhwc: (N,H,W,c_) bf16;  w2: (4*c_, c2) bf16;  b2: (1, c2) f32."""
    N, H, W, c_ = x1_nhwc.shape
    c2 = w2.shape[1]
    assert w2.shape[0] == 4 * c_
    # Row-blocks of w2 matching the implicit concat [x1, o1, o2, o3].
    wa, wb, wc, wd = (w2[i * c_:(i + 1) * c_, :] for i in range(4))

    pool_dtype = _pool_compute_dtype()
    ct, tn = _fused_tiles(H, W, c_, c2, out_bytes=2,
                          pool_bytes=jnp.dtype(pool_dtype).itemsize)

    x_spec = pl.BlockSpec((1, H, W, ct), lambda n, j, c: (n, 0, 0, c))
    w_spec = pl.BlockSpec((ct, tn), lambda n, j, c: (c, j))
    b_spec = pl.BlockSpec((1, tn), lambda n, j, c: (0, j))
    o_spec = pl.BlockSpec((1, H, W, tn), lambda n, j, c: (n, 0, 0, j))

    return pl.pallas_call(
        _sppf_pool_cv2_kernel,
        out_shape=jax.ShapeDtypeStruct((N, H, W, c2), out_dtype),
        grid=(N, c2 // tn, c_ // ct),          # reduction (c_) axis last
        in_specs=[x_spec, w_spec, w_spec, w_spec, w_spec, b_spec],
        out_specs=o_spec,
        scratch_shapes=[
            pltpu.VMEM((1, H + 2 * _PAD, W + 2 * _PAD, ct), pool_dtype),
            pltpu.VMEM((H * W, tn), jnp.float32),
        ],
        compiler_params=pltpu.CompilerParams(
            dimension_semantics=("parallel", "parallel", "arbitrary"),
            vmem_limit_bytes=_VMEM_LIMIT),
    )(x1_nhwc, wa, wb, wc, wd, b2)


# ----------------------------------------------------------------------------
# Parameter construction (deterministic; eval-mode BN folded into conv w/b).
# ----------------------------------------------------------------------------
def make_sppf_params(key, c1, c2):
    c_ = c1 // 2
    eps = 1e-3  # ultralytics Conv BatchNorm eps

    def fold(key, cin, cout):
        ks = jax.random.split(key, 5)
        w = jax.random.normal(ks[0], (cin, cout), jnp.float32) * 0.1
        gamma = 1.0 + 0.1 * jax.random.normal(ks[1], (cout,), jnp.float32)
        beta = 0.1 * jax.random.normal(ks[2], (cout,), jnp.float32)
        mean = 0.1 * jax.random.normal(ks[3], (cout,), jnp.float32)
        var = jnp.abs(jax.random.normal(ks[4], (cout,), jnp.float32)) + 0.5
        scale = gamma / jnp.sqrt(var + eps)
        w_eff = (w * scale[None, :]).astype(jnp.bfloat16)   # bf16 for the MXU
        b_eff = (beta - mean * scale)[None, :].astype(jnp.float32)
        return w_eff, b_eff

    k1, k2 = jax.random.split(key)
    w1, b1 = fold(k1, c1, c_)
    w2, b2 = fold(k2, 4 * c_, c2)
    return dict(w1=w1, b1=b1, w2=w2, b2=b2)


# ----------------------------------------------------------------------------
# SPPF forward (Pallas) and pure-JAX reference
# ----------------------------------------------------------------------------
def sppf_forward(x_nchw, params):
    N, C1, H, W = x_nchw.shape
    c_ = params["w1"].shape[1]
    c2 = params["w2"].shape[1]
    M = N * H * W

    # NHWC / channels-last so C maps onto the TPU lane dim; bf16 activations.
    x = jnp.transpose(x_nchw, (0, 2, 3, 1)).astype(jnp.bfloat16)

    # cv1: 1x1 conv + folded BN + SiLU
    x1 = conv1x1_silu(x.reshape(M, C1), params["w1"], params["b1"])   # (M, c_)
    x1_nhwc = x1.reshape(N, H, W, c_)

    # fused: cascaded 5x5 max pools (== SPP k=5,9,13) + cv2 on the implicit
    # concat [x1, o1, o2, o3]; pool outputs / concat never hit HBM.
    y = sppf_pool_cv2(x1_nhwc, params["w2"], params["b2"])            # bf16

    return jnp.transpose(y.astype(jnp.float32), (0, 3, 1, 2))         # NCHW f32


def sppf_reference(x_nchw, params):
    # Reference uses the same bf16 activation quantization at the input (the
    # port's compute contract); math in f32 via XLA reduce_window / einsum.
    x = jnp.transpose(x_nchw, (0, 2, 3, 1)).astype(jnp.bfloat16).astype(jnp.float32)
    silu = lambda v: v * jax.nn.sigmoid(v)
    w1 = params["w1"].astype(jnp.float32)
    w2 = params["w2"].astype(jnp.float32)
    y1 = silu(jnp.einsum("nhwc,cd->nhwd", x, w1) + params["b1"])

    def maxpool5(v):
        return jax.lax.reduce_window(
            v, -jnp.inf, jax.lax.max, (1, _POOL_K, _POOL_K, 1), (1, 1, 1, 1),
            padding=((0, 0), (_PAD, _PAD), (_PAD, _PAD), (0, 0)))

    y2 = maxpool5(y1)
    y3 = maxpool5(y2)
    y4 = maxpool5(y3)
    cat = jnp.concatenate([y1, y2, y3, y4], axis=-1)
    y = silu(jnp.einsum("nhwc,cd->nhwd", cat, w2) + params["b2"])
    return jnp.transpose(y, (0, 3, 1, 2))


if __name__ == "__main__":
    key = jax.random.PRNGKey(0)
    kx, kp = jax.random.split(key)

    N, C1, H, W = 2, 4, 16, 16
    C2 = 8
    x = jax.random.normal(kx, (N, C1, H, W), jnp.float32)
    params = make_sppf_params(kp, C1, C2)

    out = jax.block_until_ready(sppf_forward(x, params))
    ref = jax.block_until_ready(sppf_reference(x, params))

    assert out.shape == (N, C2, H, W), out.shape
    err = float(jnp.max(jnp.abs(out - ref)))
    assert err < 3e-2, err  # bf16 activations/MXU + bf16 output store vs f32 reference
    print("KERNEL_OK")
</pallas_src>

<mosaic_0001>
module attributes {stable_mosaic.version = 11 : i64} {
  func.func @_conv1x1_silu_kernel(%arg0: i32, %arg1: memref<256x4xbf16, #tpu.memory_space<vmem>>, %arg2: memref<4x2xbf16, #tpu.memory_space<vmem>>, %arg3: memref<1x2xf32, #tpu.memory_space<vmem>>, %arg4: memref<256x2xbf16, #tpu.memory_space<vmem>>) attributes {dimension_semantics = [#tpu.dimension_semantics<parallel>], iteration_bounds = array<i64: 2>, scalar_prefetch = 0 : i64, scratch_operands = 0 : i64, tpu.core_type = #tpu.core_type<tc>, window_params = [{transform_indices = @transform_0, window_bounds = array<i64: 256, 4>}, {pipeline_mode = #tpu.pipeline_mode<synchronous>, transform_indices = @transform_1, window_bounds = array<i64: 4, 2>}, {pipeline_mode = #tpu.pipeline_mode<synchronous>, transform_indices = @transform_2, window_bounds = array<i64: 1, 2>}, {transform_indices = @transform_3, window_bounds = array<i64: 256, 2>}]} {
    %c0 = arith.constant 0 : index
    %c0_0 = arith.constant 0 : index
    %0 = vector.load %arg1[%c0, %c0_0] : memref<256x4xbf16, #tpu.memory_space<vmem>>, vector<256x4xbf16>
    %c0_1 = arith.constant 0 : index
    %c0_2 = arith.constant 0 : index
    %1 = vector.load %arg2[%c0_1, %c0_2] : memref<4x2xbf16, #tpu.memory_space<vmem>>, vector<4x2xbf16>
    %cst = arith.constant dense<0.000000e+00> : vector<256x2xf32>
    %2 = tpu.matmul %0, %1, %cst {dimension_numbers = #tpu.dot_dimension_numbers<[1], [0], [0], [1], [0, 0, 1, 1], [], []>} : vector<256x4xbf16>, vector<4x2xbf16>, vector<256x2xf32> -> vector<256x2xf32>
    %c0_3 = arith.constant 0 : index
    %c0_4 = arith.constant 0 : index
    %3 = vector.load %arg3[%c0_3, %c0_4] : memref<1x2xf32, #tpu.memory_space<vmem>>, vector<1x2xf32>
    %4 = vector.broadcast %3 : vector<1x2xf32> to vector<256x2xf32>
    %5 = arith.addf %2, %4 : vector<256x2xf32>
    %6 = arith.negf %5 : vector<256x2xf32>
    %7 = math.exp %6 : vector<256x2xf32>
    %cst_5 = arith.constant 1.000000e+00 : f32
    %8 = vector.broadcast %cst_5 : f32 to vector<256x2xf32>
    %9 = arith.addf %8, %7 : vector<256x2xf32>
    %10 = arith.divf %8, %9 : vector<256x2xf32>
    %11 = arith.mulf %5, %10 : vector<256x2xf32>
    %12 = arith.truncf %11 : vector<256x2xf32> to vector<256x2xbf16>
    %c0_6 = arith.constant 0 : index
    %c0_7 = arith.constant 0 : index
    %13 = vector.load %arg4[%c0_6, %c0_7] : memref<256x2xbf16, #tpu.memory_space<vmem>>, vector<256x2xbf16>
    tpu.vector_store %arg4[%c0_6, %c0_7], %12 {strides = array<i32>} : memref<256x2xbf16, #tpu.memory_space<vmem>>, vector<256x2xbf16>,
    return
  }
  func.func @transform_0(%arg0: i32) -> (i32, i32) {
    %c0_i32 = arith.constant 0 : i32
    %c0_i32_0 = arith.constant 0 : i32
    return %arg0, %c0_i32 : i32, i32
  }
  func.func @transform_1(%arg0: i32) -> (i32, i32) {
    %c0_i32 = arith.constant 0 : i32
    %c0_i32_0 = arith.constant 0 : i32
    %c0_i32_1 = arith.constant 0 : i32
    return %c0_i32, %c0_i32_0 : i32, i32
  }
  func.func @transform_2(%arg0: i32) -> (i32, i32) {
    %c0_i32 = arith.constant 0 : i32
    %c0_i32_0 = arith.constant 0 : i32
    %c0_i32_1 = arith.constant 0 : i32
    return %c0_i32, %c0_i32_0 : i32, i32
  }
  func.func @transform_3(%arg0: i32) -> (i32, i32) {
    %c0_i32 = arith.constant 0 : i32
    %c0_i32_0 = arith.constant 0 : i32
    return %arg0, %c0_i32 : i32, i32
  }
}

</mosaic_0001>

<llo_original>
// kernel: tpu_custom_call.1
$region0: #{tpu_custom_call.1}
  #allocation0 [shape = 'u32[]', space=smem, size = 0x4, offset = 0x4, fixed_abs, tag = 'smem constant byte address 0x4 - core index']
  #allocation1 [shape = 'u32[72,128]{1,0:T(1,128)}', space=vmem, size = 0x9000, scoped, tag = 'internal scratch']
  %s0 = inlined_call_operand.vmem [shape: bf16[512,4], index: 0, kind: input, shape index: {}]
  %s1 = inlined_call_operand.vmem [shape: bf16[4,2], index: 1, kind: input, shape index: {}]
  %s2 = inlined_call_operand.vmem [shape: f32[1,2], index: 2, kind: input, shape index: {}]
  %s3 = inlined_call_operand.vmem [shape: bf16[512,2], index: 3, kind: output, shape index: {}]
  %s4 = sld [smem:[#allocation0]]
  $region45: #{tpu_custom_call.1} parent=0
    _
  %s6 = ssub.s32 1, %s4
  %s7 = scalar_select 0, %s6, %s4
  loop: start=0, step=1, limit=4
  $region2: #{tpu_custom_call.1} parent=0 // loop_pre_header
    _
  $region3: #{tpu_custom_call.1} parent=0 // loop_header
    %s9 = sphi 0, %s13
    %p10 = scmp.ge.s32.totalorder %s9, 4
    %s19 = sphi 0, %s21
    %s22 = sphi 0, %s19
    %s23 = sphi 0, %s22
    %s39 = sphi 0, %s23
    %s43 = sphi 0, %s43
    %s45 = sphi 0, %s43
    %s46 = sphi 0, %s45
    %s60 = sphi 0, %s46
    %s64 = sphi 0, %s64
    %s66 = sphi 0, %s64
    %s67 = sphi 0, %s66
    %s81 = sphi 0, %s67
    %s87 = sphi 0, %s89
    %s90 = sphi 0, %s87
    %s91 = sphi 0, %s90
    %s107 = sphi 0, %s91
  $region4: #{tpu_custom_call.1} parent=0 // loop_header_branch
    %12 = sbr.rel (%p10) target = $region8
  $region5: #{tpu_custom_call.1} parent=0 // loop_body
    %s14 = ssub.s32 %s9, 1
    %s15 = ssub.s32 %s9, 2
    %s16 = sadd.s32 %s9, 1
    %s17 = ssub.s32 %s9, %s16
    %p18 = scmp.eq.s32.totalorder %s17, 0
    %s20 = sadd.s32 %s19, 1
    %s21 = scalar_select %p18, %s19, %s20
    %p24 = pneg %p18
    %p25 = scmp.eq.s32.totalorder %s9, 1
    %p26 = por %p24, %p25
    %p27 = scmp.ne.s32.totalorder %s19, %s22
    %p28 = scmp.eq.s32.totalorder %s9, 0
    %p29 = por %p27, %p28
    %p30 = scmp.ne.s32.totalorder %s19, %s22
    %p31 = scmp.eq.s32.totalorder %s14, 1
    %p32 = por %p30, %p31
    %p33 = scmp.ne.s32.totalorder %s22, %s23
    %p34 = scmp.eq.s32.totalorder %s14, 0
    %p35 = por %p33, %p34
    %p36 = scmp.ne.s32.totalorder %s22, %s23
    %p37 = scmp.eq.s32.totalorder %s15, 1
    %p38 = por %p36, %p37
    %p40 = scmp.ne.s32.totalorder %s23, %s39
    %p41 = scmp.eq.s32.totalorder %s15, 0
    %p42 = por %p40, %p41
    %s44 = sadd.s32 %s43, 1
    %p47 = scmp.eq.s32.totalorder %s9, 1
    %p48 = scmp.ne.s32.totalorder %s43, %s45
    %p49 = scmp.eq.s32.totalorder %s9, 0
    %p50 = por %p48, %p49
    %p51 = scmp.ne.s32.totalorder %s43, %s45
    %p52 = scmp.eq.s32.totalorder %s14, 1
    %p53 = por %p51, %p52
    %p54 = scmp.ne.s32.totalorder %s45, %s46
    %p55 = scmp.eq.s32.totalorder %s14, 0
    %p56 = por %p54, %p55
    %p57 = scmp.ne.s32.totalorder %s45, %s46
    %p58 = scmp.eq.s32.totalorder %s15, 1
    %p59 = por %p57, %p58
    %p61 = scmp.ne.s32.totalorder %s46, %s60
    %p62 = scmp.eq.s32.totalorder %s15, 0
    %p63 = por %p61, %p62
    %s65 = sadd.s32 %s64, 1
    %p68 = scmp.eq.s32.totalorder %s9, 1
    %p69 = scmp.ne.s32.totalorder %s64, %s66
    %p70 = scmp.eq.s32.totalorder %s9, 0
    %p71 = por %p69, %p70
    %p72 = scmp.ne.s32.totalorder %s64, %s66
    %p73 = scmp.eq.s32.totalorder %s14, 1
    %p74 = por %p72, %p73
    %p75 = scmp.ne.s32.totalorder %s66, %s67
    %p76 = scmp.eq.s32.totalorder %s14, 0
    %p77 = por %p75, %p76
    %p78 = scmp.ne.s32.totalorder %s66, %s67
    %p79 = scmp.eq.s32.totalorder %s15, 1
    %p80 = por %p78, %p79
    %p82 = scmp.ne.s32.totalorder %s67, %s81
    %p83 = scmp.eq.s32.totalorder %s15, 0
    %p84 = por %p82, %p83
    %s85 = ssub.s32 %s9, %s16
    %p86 = scmp.eq.s32.totalorder %s85, 0
    %s88 = sadd.s32 %s87, 1
    %s89 = scalar_select %p86, %s87, %s88
    %p92 = pneg %p86
    %p93 = scmp.eq.s32.totalorder %s9, 1
    %p94 = por %p92, %p93
    %p95 = scmp.ne.s32.totalorder %s87, %s90
    %p96 = scmp.eq.s32.totalorder %s9, 0
    %p97 = por %p95, %p96
    %p98 = scmp.ne.s32.totalorder %s87, %s90
    %p99 = scmp.eq.s32.totalorder %s14, 1
    %p100 = por %p98, %p99
    %p101 = scmp.ne.s32.totalorder %s90, %s91
    %p102 = scmp.eq.s32.totalorder %s14, 0
    %p103 = por %p101, %p102
    %p104 = scmp.ne.s32.totalorder %s90, %s91
    %p105 = scmp.eq.s32.totalorder %s15, 1
    %p106 = por %p104, %p105
    %p108 = scmp.ne.s32.totalorder %s91, %s107
    %p109 = scmp.eq.s32.totalorder %s15, 0
    %p110 = por %p108, %p109
    %p111 = scmp.le.s32.totalorder 1, %s9
    %p112 = scmp.lt.s32.totalorder %s9, 3
    %p113 = pnand %p111, %p112
    %p114 = pneg %p113
    // Predicated region
    $region9: #{tpu_custom_call.1} parent=5 // pred_check
      _
    $region10: #{tpu_custom_call.1} parent=5 // pred_check_branch
      %116 = sbr.rel (%p113) target = $region12
    $region11: #{tpu_custom_call.1} parent=5 // pred_region
      %s117 = ssub.s32 %s9, 1
      // Predicated region
      $region13: #{tpu_custom_call.1} parent=11 // pred_check
        %p118 = pneg %p56
      $region14: #{tpu_custom_call.1} parent=11 // pred_check_branch
        %120 = sbr.rel (%p118) target = $region16
      $region15: #{tpu_custom_call.1} parent=11 // pred_region
        _
      $region16: #{tpu_custom_call.1} parent=11 // pred_fallthru
        _
      // Predicated region
      $region17: #{tpu_custom_call.1} parent=11 // pred_check
        %p121 = pneg %p77
      $region18: #{tpu_custom_call.1} parent=11 // pred_check_branch
        %123 = sbr.rel (%p121) target = $region20
      $region19: #{tpu_custom_call.1} parent=11 // pred_region
        _
      $region20: #{tpu_custom_call.1} parent=11 // pred_fallthru
        _
    $region12: #{tpu_custom_call.1} parent=5 // pred_fallthru
      _
    %p124 = scmp.lt.s32.totalorder %s9, 2
    // Predicated region
    $region21: #{tpu_custom_call.1} parent=5 // pred_check
      %p125 = pneg %p124
    $region22: #{tpu_custom_call.1} parent=5 // pred_check_branch
      %127 = sbr.rel (%p125) target = $region24
    $region23: #{tpu_custom_call.1} parent=5 // pred_region
      // Predicated region
      $region25: #{tpu_custom_call.1} parent=23 // pred_check
        %p128 = pneg %p29
      $region26: #{tpu_custom_call.1} parent=23 // pred_check_branch
        %130 = sbr.rel (%p128) target = $region28
      $region27: #{tpu_custom_call.1} parent=23 // pred_region
        %s131 = smul.u32 32, %s9
        %p132 = scmp.lt.s32.totalorder %s131, 63
        %s133 = scalar_select %p132, %s131, 63
        %s134 = smul.addr %s133, 4
        %s135 = scalar_lea.vmem %s0, %s134
        %s136 = smul.u32 32, %s9
      $region28: #{tpu_custom_call.1} parent=23 // pred_fallthru
        _
    $region24: #{tpu_custom_call.1} parent=5 // pred_fallthru
      _
    %p137 = scmp.le.s32.totalorder 1, %s9
    %p138 = scmp.lt.s32.totalorder %s9, 3
    %p139 = pnand %p137, %p138
    %p140 = pneg %p139
    // Predicated region
    $region29: #{tpu_custom_call.1} parent=5 // pred_check
      _
    $region30: #{tpu_custom_call.1} parent=5 // pred_check_branch
      %142 = sbr.rel (%p139) target = $region32
    $region31: #{tpu_custom_call.1} parent=5 // pred_region
      %s143 = ssub.s32 %s9, 1
      %s144 = smul.u32 32, %s14
      %p145 = scmp.lt.s32.totalorder %s144, 63
      %s146 = scalar_select %p145, %s144, 63
      %s147 = smul.addr %s146, 4
      %s148 = scalar_lea.vmem %s0, %s147
      %p149 = pneg %p35
      %p150 = pneg %p32
      %p151 = pneg %p56
      %p152 = pneg %p53
      %p153 = pneg %p77
      %p154 = pneg %p74
      %p155 = pneg %p103
      %p156 = pneg %p100
      %s157 = smul.u32 32, %s14
      %p158 = scmp.lt.s32.totalorder %s157, 63
      %s159 = scalar_select %p158, %s157, 63
      %s160 = smul.addr %s159, 4
      %s161 = scalar_lea.vmem %s3, %s160
      %s162 = smul.u32 32, %s14
      %p163 = scmp.lt.s32.totalorder %s162, 63
      %s164 = scalar_select %p163, %s162, 63
      %s165 = smul.addr %s164, 4
      %s166 = scalar_lea.vmem %s0, %s165
      %s167 = smul.u32 32, %s14
      %s168 = smul.u32 32, %s14
      %p169 = scmp.lt.s32.totalorder %s168, 63
      %s170 = scalar_select %p169, %s168, 63
      %s171 = smul.addr %s170, 4
      %s172 = scalar_lea.vmem %s3, %s171
      %s173 = smul.u32 32, %s14
      %v175 = vld [vmem:[%s166] sm:$0xf]
      %v176 = vld [vmem:[%s166 + $0x4] sm:$0xf]
      %v177 = vld [vmem:[%s166 + $0x8] sm:$0xf]
      %v178 = vld [vmem:[%s166 + $0xc] sm:$0xf]
      %v179 = vld [vmem:[%s166 + $0x10] sm:$0xf]
      %v180 = vld [vmem:[%s166 + $0x14] sm:$0xf]
      %v181 = vld [vmem:[%s166 + $0x18] sm:$0xf]
      %v182 = vld [vmem:[%s166 + $0x1c] sm:$0xf]
      %v183 = vld [vmem:[%s166 + $0x20] sm:$0xf]
      %v184 = vld [vmem:[%s166 + $0x24] sm:$0xf]
      %v185 = vld [vmem:[%s166 + $0x28] sm:$0xf]
      %v186 = vld [vmem:[%s166 + $0x2c] sm:$0xf]
      %v187 = vld [vmem:[%s166 + $0x30] sm:$0xf]
      %v188 = vld [vmem:[%s166 + $0x34] sm:$0xf]
      %v189 = vld [vmem:[%s166 + $0x38] sm:$0xf]
      %v190 = vld [vmem:[%s166 + $0x3c] sm:$0xf]
      %v191 = vld [vmem:[%s166 + $0x40] sm:$0xf]
      %v192 = vld [vmem:[%s166 + $0x44] sm:$0xf]
      %v193 = vld [vmem:[%s166 + $0x48] sm:$0xf]
      %v194 = vld [vmem:[%s166 + $0x4c] sm:$0xf]
      %v195 = vld [vmem:[%s166 + $0x50] sm:$0xf]
      %v196 = vld [vmem:[%s166 + $0x54] sm:$0xf]
      %v197 = vld [vmem:[%s166 + $0x58] sm:$0xf]
      %v198 = vld [vmem:[%s166 + $0x5c] sm:$0xf]
      %v199 = vld [vmem:[%s166 + $0x60] sm:$0xf]
      %v200 = vld [vmem:[%s166 + $0x64] sm:$0xf]
      %v201 = vld [vmem:[%s166 + $0x68] sm:$0xf]
      %v202 = vld [vmem:[%s166 + $0x6c] sm:$0xf]
      %v203 = vld [vmem:[%s166 + $0x70] sm:$0xf]
      %v204 = vld [vmem:[%s166 + $0x74] sm:$0xf]
      %v205 = vld [vmem:[%s166 + $0x78] sm:$0xf]
      %v206 = vld [vmem:[%s166 + $0x7c] sm:$0xf]
      %v207 = vld [vmem:[%s1] sm:$0x3]
      %v208 = vld [vmem:[%s2] sm:$0x1]
      %v210 = vperm.slane %v208, 0
      %v244 = vunpack.c.l.b16 %v175
      %v245 = vunpack.c.l.b16 %v176
      %v246 = vunpack.c.l.b16 %v177
      %v247 = vunpack.c.l.b16 %v178
      %v248 = vunpack.c.l.b16 %v179
      %v249 = vunpack.c.l.b16 %v180
      %v250 = vunpack.c.l.b16 %v181
      %v251 = vunpack.c.l.b16 %v182
      %v252 = vunpack.c.l.b16 %v183
      %v253 = vunpack.c.l.b16 %v184
      %v254 = vunpack.c.l.b16 %v185
      %v255 = vunpack.c.l.b16 %v186
      %v256 = vunpack.c.l.b16 %v187
      %v257 = vunpack.c.l.b16 %v188
      %v258 = vunpack.c.l.b16 %v189
      %v259 = vunpack.c.l.b16 %v190
      %v260 = vunpack.c.l.b16 %v191
      %v261 = vunpack.c.l.b16 %v192
      %v262 = vunpack.c.l.b16 %v193
      %v263 = vunpack.c.l.b16 %v194
      %v264 = vunpack.c.l.b16 %v195
      %v265 = vunpack.c.l.b16 %v196
      %v266 = vunpack.c.l.b16 %v197
      %v267 = vunpack.c.l.b16 %v198
      %v268 = vunpack.c.l.b16 %v199
      %v269 = vunpack.c.l.b16 %v200
      %v270 = vunpack.c.l.b16 %v201
      %v271 = vunpack.c.l.b16 %v202
      %v272 = vunpack.c.l.b16 %v203
      %v273 = vunpack.c.l.b16 %v204
      %v274 = vunpack.c.l.b16 %v205
      %v275 = vunpack.c.l.b16 %v206
      %v276 = vpack.c.b16 %v245, %v244
      %v277 = vpack.c.b16 %v247, %v246
      %v278 = vpack.c.b16 %v249, %v248
      %v279 = vpack.c.b16 %v251, %v250
      %v280 = vpack.c.b16 %v253, %v252
      %v281 = vpack.c.b16 %v255, %v254
      %v282 = vpack.c.b16 %v257, %v256
      %v283 = vpack.c.b16 %v259, %v258
      %v284 = vpack.c.b16 %v261, %v260
      %v285 = vpack.c.b16 %v263, %v262
      %v286 = vpack.c.b16 %v265, %v264
      %v287 = vpack.c.b16 %v267, %v266
      %v288 = vpack.c.b16 %v269, %v268
      %v289 = vpack.c.b16 %v271, %v270
      %v290 = vpack.c.b16 %v273, %v272
      %v291 = vpack.c.b16 %v275, %v274
      %vm292 = vcmask 31744
      %v294 = vsel %vm292, %v276, 0
      %v297 = vsel %vm292, %v277, 0
      %v300 = vsel %vm292, %v278, 0
      %v303 = vsel %vm292, %v279, 0
      %v306 = vsel %vm292, %v280, 0
      %v309 = vsel %vm292, %v281, 0
      %v312 = vsel %vm292, %v282, 0
      %v315 = vsel %vm292, %v283, 0
      %v318 = vsel %vm292, %v284, 0
      %v321 = vsel %vm292, %v285, 0
      %v324 = vsel %vm292, %v286, 0
      %v327 = vsel %vm292, %v287, 0
      %v330 = vsel %vm292, %v288, 0
      %v333 = vsel %vm292, %v289, 0
      %v336 = vsel %vm292, %v290, 0
      %v339 = vsel %vm292, %v291, 0
      %vm341 = vcmask 1041408
      %v343 = vsel %vm341, %v207, 0
      %345 = vmatpush.bf16.msra.mxu0 0
      %346 = vmatpush.bf16.msra.mxu0 0
      %347 = vmatpush.bf16.msra.mxu0 0
      %348 = vmatpush.bf16.msra.mxu0 0
      %349 = vmatpush.bf16.msra.mxu0 0
      %350 = vmatpush.bf16.msra.mxu0 0
      %351 = vmatpush.bf16.msra.mxu0 0
      %352 = vmatpush.bf16.msra.mxu0 %v343
      %353 = vmatmul.bf16.gmra.mxu0 %v294
      %v354 = vpop.f32.mrf.mxu0
      %v355 = vadd.f32 %v210, %v354
      %v356 = vpop.f32.mrf.mxu0
      %v357 = vadd.f32 %v210, %v356
      %358 = vmatmul.bf16.gmra.mxu0 %v297
      %v359 = vpop.f32.mrf.mxu0
      %v360 = vadd.f32 %v210, %v359
      %v361 = vpop.f32.mrf.mxu0
      %v362 = vadd.f32 %v210, %v361
      %363 = vmatmul.bf16.gmra.mxu0 %v300
      %v364 = vpop.f32.mrf.mxu0
      %v365 = vadd.f32 %v210, %v364
      %v366 = vpop.f32.mrf.mxu0
      %v367 = vadd.f32 %v210, %v366
      %368 = vmatmul.bf16.gmra.mxu0 %v303
      %v369 = vpop.f32.mrf.mxu0
      %v370 = vadd.f32 %v210, %v369
      %v371 = vpop.f32.mrf.mxu0
      %v372 = vadd.f32 %v210, %v371
      %373 = vmatmul.bf16.gmra.mxu0 %v306
      %v374 = vpop.f32.mrf.mxu0
      %v375 = vadd.f32 %v210, %v374
      %v376 = vpop.f32.mrf.mxu0
      %v377 = vadd.f32 %v210, %v376
      %378 = vmatmul.bf16.gmra.mxu0 %v309
      %v379 = vpop.f32.mrf.mxu0
      %v380 = vadd.f32 %v210, %v379
      %v381 = vpop.f32.mrf.mxu0
      %v382 = vadd.f32 %v210, %v381
      %383 = vmatmul.bf16.gmra.mxu0 %v312
      %v384 = vpop.f32.mrf.mxu0
      %v385 = vadd.f32 %v210, %v384
      %v386 = vpop.f32.mrf.mxu0
      %v387 = vadd.f32 %v210, %v386
      %388 = vmatmul.bf16.gmra.mxu0 %v315
      %v389 = vpop.f32.mrf.mxu0
      %v390 = vadd.f32 %v210, %v389
      %v391 = vpop.f32.mrf.mxu0
      %v392 = vadd.f32 %v210, %v391
      %393 = vmatmul.bf16.gmra.mxu0 %v318
      %v394 = vpop.f32.mrf.mxu0
      %v395 = vadd.f32 %v210, %v394
      %v396 = vpop.f32.mrf.mxu0
      %v397 = vadd.f32 %v210, %v396
      %398 = vmatmul.bf16.gmra.mxu0 %v321
      %v399 = vpop.f32.mrf.mxu0
      %v400 = vadd.f32 %v210, %v399
      %v401 = vpop.f32.mrf.mxu0
      %v402 = vadd.f32 %v210, %v401
      %403 = vmatmul.bf16.gmra.mxu0 %v324
      %v404 = vpop.f32.mrf.mxu0
      %v405 = vadd.f32 %v210, %v404
      %v406 = vpop.f32.mrf.mxu0
      %v407 = vadd.f32 %v210, %v406
      %408 = vmatmul.bf16.gmra.mxu0 %v327
      %v409 = vpop.f32.mrf.mxu0
      %v410 = vadd.f32 %v210, %v409
      %v411 = vpop.f32.mrf.mxu0
      %v412 = vadd.f32 %v210, %v411
      %413 = vmatmul.bf16.gmra.mxu0 %v330
      %v414 = vpop.f32.mrf.mxu0
      %v415 = vadd.f32 %v210, %v414
      %v416 = vpop.f32.mrf.mxu0
      %v417 = vadd.f32 %v210, %v416
      %418 = vmatmul.bf16.gmra.mxu0 %v333
      %v419 = vpop.f32.mrf.mxu0
      %v420 = vadd.f32 %v210, %v419
      %v421 = vpop.f32.mrf.mxu0
      %v422 = vadd.f32 %v210, %v421
      %423 = vmatmul.bf16.gmra.mxu0 %v336
      %v424 = vpop.f32.mrf.mxu0
      %v425 = vadd.f32 %v210, %v424
      %v426 = vpop.f32.mrf.mxu0
      %v427 = vadd.f32 %v210, %v426
      %428 = vmatmul.bf16.gmra.mxu0 %v339
      %v429 = vpop.f32.mrf.mxu0
      %v430 = vadd.f32 %v210, %v429
      %v431 = vpop.f32.mrf.mxu0
      %v432 = vadd.f32 %v210, %v431
      %433 = vdwg.mxu0
      %v434 = vxor.u32 %v355, 2147483648
      %v435 = vxor.u32 %v357, 2147483648
      %v436 = vxor.u32 %v360, 2147483648
      %v437 = vxor.u32 %v362, 2147483648
      %v438 = vxor.u32 %v365, 2147483648
      %v439 = vxor.u32 %v367, 2147483648
      %v440 = vxor.u32 %v370, 2147483648
      %v441 = vxor.u32 %v372, 2147483648
      %v442 = vxor.u32 %v375, 2147483648
      %v443 = vxor.u32 %v377, 2147483648
      %v444 = vxor.u32 %v380, 2147483648
      %v445 = vxor.u32 %v382, 2147483648
      %v446 = vxor.u32 %v385, 2147483648
      %v447 = vxor.u32 %v387, 2147483648
      %v448 = vxor.u32 %v390, 2147483648
      %v449 = vxor.u32 %v392, 2147483648
      %v450 = vxor.u32 %v395, 2147483648
      %v451 = vxor.u32 %v397, 2147483648
      %v452 = vxor.u32 %v400, 2147483648
      %v453 = vxor.u32 %v402, 2147483648
      %v454 = vxor.u32 %v405, 2147483648
      %v455 = vxor.u32 %v407, 2147483648
      %v456 = vxor.u32 %v410, 2147483648
      %v457 = vxor.u32 %v412, 2147483648
      %v458 = vxor.u32 %v415, 2147483648
      %v459 = vxor.u32 %v417, 2147483648
      %v460 = vxor.u32 %v420, 2147483648
      %v461 = vxor.u32 %v422, 2147483648
      %v462 = vxor.u32 %v425, 2147483648
      %v463 = vxor.u32 %v427, 2147483648
      %v464 = vxor.u32 %v430, 2147483648
      %v465 = vxor.u32 %v432, 2147483648
      %v466 = vmul.f32 %v434, 1.442695
      %v467 = vpow.pop %v466
      %v468 = vmul.f32 %v435, 1.442695
      %v469 = vpow.pop %v468
      %v470 = vmul.f32 %v436, 1.442695
      %v471 = vpow.pop %v470
      %v472 = vmul.f32 %v437, 1.442695
      %v473 = vpow.pop %v472
      %v474 = vmul.f32 %v438, 1.442695
      %v475 = vpow.pop %v474
      %v476 = vmul.f32 %v439, 1.442695
      %v477 = vpow.pop %v476
      %v478 = vmul.f32 %v440, 1.442695
      %v479 = vpow.pop %v478
      %v480 = vmul.f32 %v441, 1.442695
      %v481 = vpow.pop %v480
      %v482 = vmul.f32 %v442, 1.442695
      %v483 = vpow.pop %v482
      %v484 = vmul.f32 %v443, 1.442695
      %v485 = vpow.pop %v484
      %v486 = vmul.f32 %v444, 1.442695
      %v487 = vpow.pop %v486
      %v488 = vmul.f32 %v445, 1.442695
      %v489 = vpow.pop %v488
      %v490 = vmul.f32 %v446, 1.442695
      %v491 = vpow.pop %v490
      %v492 = vmul.f32 %v447, 1.442695
      %v493 = vpow.pop %v492
      %v494 = vmul.f32 %v448, 1.442695
      %v495 = vpow.pop %v494
      %v496 = vmul.f32 %v449, 1.442695
      %v497 = vpow.pop %v496
      %v498 = vmul.f32 %v450, 1.442695
      %v499 = vpow.pop %v498
      %v500 = vmul.f32 %v451, 1.442695
      %v501 = vpow.pop %v500
      %v502 = vmul.f32 %v452, 1.442695
      %v503 = vpow.pop %v502
      %v504 = vmul.f32 %v453, 1.442695
      %v505 = vpow.pop %v504
      %v506 = vmul.f32 %v454, 1.442695
      %v507 = vpow.pop %v506
      %v508 = vmul.f32 %v455, 1.442695
      %v509 = vpow.pop %v508
      %v510 = vmul.f32 %v456, 1.442695
      %v511 = vpow.pop %v510
      %v512 = vmul.f32 %v457, 1.442695
      %v513 = vpow.pop %v512
      %v514 = vmul.f32 %v458, 1.442695
      %v515 = vpow.pop %v514
      %v516 = vmul.f32 %v459, 1.442695
      %v517 = vpow.pop %v516
      %v518 = vmul.f32 %v460, 1.442695
      %v519 = vpow.pop %v518
      %v520 = vmul.f32 %v461, 1.442695
      %v521 = vpow.pop %v520
      %v522 = vmul.f32 %v462, 1.442695
      %v523 = vpow.pop %v522
      %v524 = vmul.f32 %v463, 1.442695
      %v525 = vpow.pop %v524
      %v526 = vmul.f32 %v464, 1.442695
      %v527 = vpow.pop %v526
      %v528 = vmul.f32 %v465, 1.442695
      %v529 = vpow.pop %v528
      %v530 = vadd.f32 %v467, 1.0
      %v531 = vadd.f32 %v469, 1.0
      %v532 = vadd.f32 %v471, 1.0
      %v533 = vadd.f32 %v473, 1.0
      %v534 = vadd.f32 %v475, 1.0
      %v535 = vadd.f32 %v477, 1.0
      %v536 = vadd.f32 %v479, 1.0
      %v537 = vadd.f32 %v481, 1.0
      %v538 = vadd.f32 %v483, 1.0
      %v539 = vadd.f32 %v485, 1.0
      %v540 = vadd.f32 %v487, 1.0
      %v541 = vadd.f32 %v489, 1.0
      %v542 = vadd.f32 %v491, 1.0
      %v543 = vadd.f32 %v493, 1.0
      %v544 = vadd.f32 %v495, 1.0
      %v545 = vadd.f32 %v497, 1.0
      %v546 = vadd.f32 %v499, 1.0
      %v547 = vadd.f32 %v501, 1.0
      %v548 = vadd.f32 %v503, 1.0
      %v549 = vadd.f32 %v505, 1.0
      %v550 = vadd.f32 %v507, 1.0
      %v551 = vadd.f32 %v509, 1.0
      %v552 = vadd.f32 %v511, 1.0
      %v553 = vadd.f32 %v513, 1.0
      %v554 = vadd.f32 %v515, 1.0
      %v555 = vadd.f32 %v517, 1.0
      %v556 = vadd.f32 %v519, 1.0
      %v557 = vadd.f32 %v521, 1.0
      %v558 = vadd.f32 %v523, 1.0
      %v559 = vadd.f32 %v525, 1.0
      %v560 = vadd.f32 %v527, 1.0
      %v561 = vadd.f32 %v529, 1.0
      %v562 = vrcp.pop %v530
      %v563 = vmul.f32 %v530, %v562
      %v564 = vsub.f32 1.0, %v563
      %v565 = vmul.f32 %v562, %v564
      %v566 = vadd.f32 %v562, %v565
      %vm567 = vweird.f32 %v530
      %vm568 = vweird.f32 %v562
      %vm569 = vmor %vm567, %vm568
      %v570 = vsel %vm569, %v562, %v566
      %v571 = vand.u32 2147483647, %v530
      %vm572 = vcmp.eq.f32.partialorder %v571, 8.507059e+37
      %v573 = vand.u32 %v530, 2147483648
      %v574 = vor.u32 1.1754944e-38, %v573
      %v575 = vsel %vm572, %v574, %v570
      %v576 = vmul.f32 1.0, %v575
      %v577 = vrcp.pop %v531
      %v578 = vmul.f32 %v531, %v577
      %v579 = vsub.f32 1.0, %v578
      %v580 = vmul.f32 %v577, %v579
      %v581 = vadd.f32 %v577, %v580
      %vm582 = vweird.f32 %v531
      %vm583 = vweird.f32 %v577
      %vm584 = vmor %vm582, %vm583
      %v585 = vsel %vm584, %v577, %v581
      %v586 = vand.u32 2147483647, %v531
      %vm587 = vcmp.eq.f32.partialorder %v586, 8.507059e+37
      %v588 = vand.u32 %v531, 2147483648
      %v589 = vor.u32 1.1754944e-38, %v588
      %v590 = vsel %vm587, %v589, %v585
      %v591 = vmul.f32 1.0, %v590
      %v592 = vrcp.pop %v532
      %v593 = vmul.f32 %v532, %v592
      %v594 = vsub.f32 1.0, %v593
      %v595 = vmul.f32 %v592, %v594
      %v596 = vadd.f32 %v592, %v595
      %vm597 = vweird.f32 %v532
      %vm598 = vweird.f32 %v592
      %vm599 = vmor %vm597, %vm598
      %v600 = vsel %vm599, %v592, %v596
      %v601 = vand.u32 2147483647, %v532
      %vm602 = vcmp.eq.f32.partialorder %v601, 8.507059e+37
      %v603 = vand.u32 %v532, 2147483648
      %v604 = vor.u32 1.1754944e-38, %v603
      %v605 = vsel %vm602, %v604, %v600
      %v606 = vmul.f32 1.0, %v605
      %v607 = vrcp.pop %v533
      %v608 = vmul.f32 %v533, %v607
      %v609 = vsub.f32 1.0, %v608
      %v610 = vmul.f32 %v607, %v609
      %v611 = vadd.f32 %v607, %v610
      %vm612 = vweird.f32 %v533
      %vm613 = vweird.f32 %v607
      %vm614 = vmor %vm612, %vm613
      %v615 = vsel %vm614, %v607, %v611
      %v616 = vand.u32 2147483647, %v533
      %vm617 = vcmp.eq.f32.partialorder %v616, 8.507059e+37
      %v618 = vand.u32 %v533, 2147483648
      %v619 = vor.u32 1.1754944e-38, %v618
      %v620 = vsel %vm617, %v619, %v615
      %v621 = vmul.f32 1.0, %v620
      %v622 = vrcp.pop %v534
      %v623 = vmul.f32 %v534, %v622
      %v624 = vsub.f32 1.0, %v623
      %v625 = vmul.f32 %v622, %v624
      %v626 = vadd.f32 %v622, %v625
      %vm627 = vweird.f32 %v534
      %vm628 = vweird.f32 %v622
      %vm629 = vmor %vm627, %vm628
      %v630 = vsel %vm629, %v622, %v626
      %v631 = vand.u32 2147483647, %v534
      %vm632 = vcmp.eq.f32.partialorder %v631, 8.507059e+37
      %v633 = vand.u32 %v534, 2147483648
      %v634 = vor.u32 1.1754944e-38, %v633
      %v635 = vsel %vm632, %v634, %v630
      %v636 = vmul.f32 1.0, %v635
      %v637 = vrcp.pop %v535
      %v638 = vmul.f32 %v535, %v637
      %v639 = vsub.f32 1.0, %v638
      %v640 = vmul.f32 %v637, %v639
      %v641 = vadd.f32 %v637, %v640
      %vm642 = vweird.f32 %v535
      %vm643 = vweird.f32 %v637
      %vm644 = vmor %vm642, %vm643
      %v645 = vsel %vm644, %v637, %v641
      %v646 = vand.u32 2147483647, %v535
      %vm647 = vcmp.eq.f32.partialorder %v646, 8.507059e+37
      %v648 = vand.u32 %v535, 2147483648
      %v649 = vor.u32 1.1754944e-38, %v648
      %v650 = vsel %vm647, %v649, %v645
      %v651 = vmul.f32 1.0, %v650
      %v652 = vrcp.pop %v536
      %v653 = vmul.f32 %v536, %v652
      %v654 = vsub.f32 1.0, %v653
      %v655 = vmul.f32 %v652, %v654
      %v656 = vadd.f32 %v652, %v655
      %vm657 = vweird.f32 %v536
      %vm658 = vweird.f32 %v652
      %vm659 = vmor %vm657, %vm658
      %v660 = vsel %vm659, %v652, %v656
      %v661 = vand.u32 2147483647, %v536
      %vm662 = vcmp.eq.f32.partialorder %v661, 8.507059e+37
      %v663 = vand.u32 %v536, 2147483648
      %v664 = vor.u32 1.1754944e-38, %v663
      %v665 = vsel %vm662, %v664, %v660
      %v666 = vmul.f32 1.0, %v665
      %v667 = vrcp.pop %v537
      %v668 = vmul.f32 %v537, %v667
      %v669 = vsub.f32 1.0, %v668
      %v670 = vmul.f32 %v667, %v669
      %v671 = vadd.f32 %v667, %v670
      %vm672 = vweird.f32 %v537
      %vm673 = vweird.f32 %v667
      %vm674 = vmor %vm672, %vm673
      %v675 = vsel %vm674, %v667, %v671
      %v676 = vand.u32 2147483647, %v537
      %vm677 = vcmp.eq.f32.partialorder %v676, 8.507059e+37
      %v678 = vand.u32 %v537, 2147483648
      %v679 = vor.u32 1.1754944e-38, %v678
      %v680 = vsel %vm677, %v679, %v675
      %v681 = vmul.f32 1.0, %v680
      %v682 = vrcp.pop %v538
      %v683 = vmul.f32 %v538, %v682
      %v684 = vsub.f32 1.0, %v683
      %v685 = vmul.f32 %v682, %v684
      %v686 = vadd.f32 %v682, %v685
      %vm687 = vweird.f32 %v538
      %vm688 = vweird.f32 %v682
      %vm689 = vmor %vm687, %vm688
      %v690 = vsel %vm689, %v682, %v686
      %v691 = vand.u32 2147483647, %v538
      %vm692 = vcmp.eq.f32.partialorder %v691, 8.507059e+37
      %v693 = vand.u32 %v538, 2147483648
      %v694 = vor.u32 1.1754944e-38, %v693
      %v695 = vsel %vm692, %v694, %v690
      %v696 = vmul.f32 1.0, %v695
      %v697 = vrcp.pop %v539
      %v698 = vmul.f32 %v539, %v697
      %v699 = vsub.f32 1.0, %v698
      %v700 = vmul.f32 %v697, %v699
      %v701 = vadd.f32 %v697, %v700
      %vm702 = vweird.f32 %v539
      %vm703 = vweird.f32 %v697
      %vm704 = vmor %vm702, %vm703
      %v705 = vsel %vm704, %v697, %v701
      %v706 = vand.u32 2147483647, %v539
      %vm707 = vcmp.eq.f32.partialorder %v706, 8.507059e+37
      %v708 = vand.u32 %v539, 2147483648
      %v709 = vor.u32 1.1754944e-38, %v708
      %v710 = vsel %vm707, %v709, %v705
      %v711 = vmul.f32 1.0, %v710
      %v712 = vrcp.pop %v540
      %v713 = vmul.f32 %v540, %v712
      %v714 = vsub.f32 1.0, %v713
      %v715 = vmul.f32 %v712, %v714
      %v716 = vadd.f32 %v712, %v715
      %vm717 = vweird.f32 %v540
      %vm718 = vweird.f32 %v712
      %vm719 = vmor %vm717, %vm718
      %v720 = vsel %vm719, %v712, %v716
      %v721 = vand.u32 2147483647, %v540
      %vm722 = vcmp.eq.f32.partialorder %v721, 8.507059e+37
      %v723 = vand.u32 %v540, 2147483648
      %v724 = vor.u32 1.1754944e-38, %v723
      %v725 = vsel %vm722, %v724, %v720
      %v726 = vmul.f32 1.0, %v725
      %v727 = vrcp.pop %v541
      %v728 = vmul.f32 %v541, %v727
      %v729 = vsub.f32 1.0, %v728
      %v730 = vmul.f32 %v727, %v729
      %v731 = vadd.f32 %v727, %v730
      %vm732 = vweird.f32 %v541
      %vm733 = vweird.f32 %v727
      %vm734 = vmor %vm732, %vm733
      %v735 = vsel %vm734, %v727, %v731
      %v736 = vand.u32 2147483647, %v541
      %vm737 = vcmp.eq.f32.partialorder %v736, 8.507059e+37
      %v738 = vand.u32 %v541, 2147483648
      %v739 = vor.u32 1.1754944e-38, %v738
      %v740 = vsel %vm737, %v739, %v735
      %v741 = vmul.f32 1.0, %v740
      %v742 = vrcp.pop %v542
      %v743 = vmul.f32 %v542, %v742
      %v744 = vsub.f32 1.0, %v743
      %v745 = vmul.f32 %v742, %v744
      %v746 = vadd.f32 %v742, %v745
      %vm747 = vweird.f32 %v542
      %vm748 = vweird.f32 %v742
      %vm749 = vmor %vm747, %vm748
      %v750 = vsel %vm749, %v742, %v746
      %v751 = vand.u32 2147483647, %v542
      %vm752 = vcmp.eq.f32.partialorder %v751, 8.507059e+37
      %v753 = vand.u32 %v542, 2147483648
      %v754 = vor.u32 1.1754944e-38, %v753
      %v755 = vsel %vm752, %v754, %v750
      %v756 = vmul.f32 1.0, %v755
      %v757 = vrcp.pop %v543
      %v758 = vmul.f32 %v543, %v757
      %v759 = vsub.f32 1.0, %v758
      %v760 = vmul.f32 %v757, %v759
      %v761 = vadd.f32 %v757, %v760
      %vm762 = vweird.f32 %v543
      %vm763 = vweird.f32 %v757
      %vm764 = vmor %vm762, %vm763
      %v765 = vsel %vm764, %v757, %v761
      %v766 = vand.u32 2147483647, %v543
      %vm767 = vcmp.eq.f32.partialorder %v766, 8.507059e+37
      %v768 = vand.u32 %v543, 2147483648
      %v769 = vor.u32 1.1754944e-38, %v768
      %v770 = vsel %vm767, %v769, %v765
      %v771 = vmul.f32 1.0, %v770
      %v772 = vrcp.pop %v544
      %v773 = vmul.f32 %v544, %v772
      %v774 = vsub.f32 1.0, %v773
      %v775 = vmul.f32 %v772, %v774
      %v776 = vadd.f32 %v772, %v775
      %vm777 = vweird.f32 %v544
      %vm778 = vweird.f32 %v772
      %vm779 = vmor %vm777, %vm778
      %v780 = vsel %vm779, %v772, %v776
      %v781 = vand.u32 2147483647, %v544
      %vm782 = vcmp.eq.f32.partialorder %v781, 8.507059e+37
      %v783 = vand.u32 %v544, 2147483648
      %v784 = vor.u32 1.1754944e-38, %v783
      %v785 = vsel %vm782, %v784, %v780
      %v786 = vmul.f32 1.0, %v785
      %v787 = vrcp.pop %v545
      %v788 = vmul.f32 %v545, %v787
      %v789 = vsub.f32 1.0, %v788
      %v790 = vmul.f32 %v787, %v789
      %v791 = vadd.f32 %v787, %v790
      %vm792 = vweird.f32 %v545
      %vm793 = vweird.f32 %v787
      %vm794 = vmor %vm792, %vm793
      %v795 = vsel %vm794, %v787, %v791
      %v796 = vand.u32 2147483647, %v545
      %vm797 = vcmp.eq.f32.partialorder %v796, 8.507059e+37
      %v798 = vand.u32 %v545, 2147483648
      %v799 = vor.u32 1.1754944e-38, %v798
      %v800 = vsel %vm797, %v799, %v795
      %v801 = vmul.f32 1.0, %v800
      %v802 = vrcp.pop %v546
      %v803 = vmul.f32 %v546, %v802
      %v804 = vsub.f32 1.0, %v803
      %v805 = vmul.f32 %v802, %v804
      %v806 = vadd.f32 %v802, %v805
      %vm807 = vweird.f32 %v546
      %vm808 = vweird.f32 %v802
      %vm809 = vmor %vm807, %vm808
      %v810 = vsel %vm809, %v802, %v806
      %v811 = vand.u32 2147483647, %v546
      %vm812 = vcmp.eq.f32.partialorder %v811, 8.507059e+37
      %v813 = vand.u32 %v546, 2147483648
      %v814 = vor.u32 1.1754944e-38, %v813
      %v815 = vsel %vm812, %v814, %v810
      %v816 = vmul.f32 1.0, %v815
      %v817 = vrcp.pop %v547
      %v818 = vmul.f32 %v547, %v817
      %v819 = vsub.f32 1.0, %v818
      %v820 = vmul.f32 %v817, %v819
      %v821 = vadd.f32 %v817, %v820
      %vm822 = vweird.f32 %v547
      %vm823 = vweird.f32 %v817
      %vm824 = vmor %vm822, %vm823
      %v825 = vsel %vm824, %v817, %v821
      %v826 = vand.u32 2147483647, %v547
      %vm827 = vcmp.eq.f32.partialorder %v826, 8.507059e+37
      %v828 = vand.u32 %v547, 2147483648
      %v829 = vor.u32 1.1754944e-38, %v828
      %v830 = vsel %vm827, %v829, %v825
      %v831 = vmul.f32 1.0, %v830
      %v832 = vrcp.pop %v548
      %v833 = vmul.f32 %v548, %v832
      %v834 = vsub.f32 1.0, %v833
      %v835 = vmul.f32 %v832, %v834
      %v836 = vadd.f32 %v832, %v835
      %vm837 = vweird.f32 %v548
      %vm838 = vweird.f32 %v832
      %vm839 = vmor %vm837, %vm838
      %v840 = vsel %vm839, %v832, %v836
      %v841 = vand.u32 2147483647, %v548
      %vm842 = vcmp.eq.f32.partialorder %v841, 8.507059e+37
      %v843 = vand.u32 %v548, 2147483648
      %v844 = vor.u32 1.1754944e-38, %v843
      %v845 = vsel %vm842, %v844, %v840
      %v846 = vmul.f32 1.0, %v845
      %v847 = vrcp.pop %v549
      %v848 = vmul.f32 %v549, %v847
      %v849 = vsub.f32 1.0, %v848
      %v850 = vmul.f32 %v847, %v849
      %v851 = vadd.f32 %v847, %v850
      %vm852 = vweird.f32 %v549
      %vm853 = vweird.f32 %v847
      %vm854 = vmor %vm852, %vm853
      %v855 = vsel %vm854, %v847, %v851
      %v856 = vand.u32 2147483647, %v549
      %vm857 = vcmp.eq.f32.partialorder %v856, 8.507059e+37
      %v858 = vand.u32 %v549, 2147483648
      %v859 = vor.u32 1.1754944e-38, %v858
      %v860 = vsel %vm857, %v859, %v855
      %v861 = vmul.f32 1.0, %v860
      %v862 = vrcp.pop %v550
      %v863 = vmul.f32 %v550, %v862
      %v864 = vsub.f32 1.0, %v863
      %v865 = vmul.f32 %v862, %v864
      %v866 = vadd.f32 %v862, %v865
      %vm867 = vweird.f32 %v550
      %vm868 = vweird.f32 %v862
      %vm869 = vmor %vm867, %vm868
      %v870 = vsel %vm869, %v862, %v866
      %v871 = vand.u32 2147483647, %v550
      %vm872 = vcmp.eq.f32.partialorder %v871, 8.507059e+37
      %v873 = vand.u32 %v550, 2147483648
      %v874 = vor.u32 1.1754944e-38, %v873
      %v875 = vsel %vm872, %v874, %v870
      %v876 = vmul.f32 1.0, %v875
      %v877 = vrcp.pop %v551
      %v878 = vmul.f32 %v551, %v877
      %v879 = vsub.f32 1.0, %v878
      %v880 = vmul.f32 %v877, %v879
      %v881 = vadd.f32 %v877, %v880
      %vm882 = vweird.f32 %v551
      %vm883 = vweird.f32 %v877
      %vm884 = vmor %vm882, %vm883
      %v885 = vsel %vm884, %v877, %v881
      %v886 = vand.u32 2147483647, %v551
      %vm887 = vcmp.eq.f32.partialorder %v886, 8.507059e+37
      %v888 = vand.u32 %v551, 2147483648
      %v889 = vor.u32 1.1754944e-38, %v888
      %v890 = vsel %vm887, %v889, %v885
      %v891 = vmul.f32 1.0, %v890
      %v892 = vrcp.pop %v552
      %v893 = vmul.f32 %v552, %v892
      %v894 = vsub.f32 1.0, %v893
      %v895 = vmul.f32 %v892, %v894
      %v896 = vadd.f32 %v892, %v895
      %vm897 = vweird.f32 %v552
      %vm898 = vweird.f32 %v892
      %vm899 = vmor %vm897, %vm898
      %v900 = vsel %vm899, %v892, %v896
      %v901 = vand.u32 2147483647, %v552
      %vm902 = vcmp.eq.f32.partialorder %v901, 8.507059e+37
      %v903 = vand.u32 %v552, 2147483648
      %v904 = vor.u32 1.1754944e-38, %v903
      %v905 = vsel %vm902, %v904, %v900
      %v906 = vmul.f32 1.0, %v905
      %v907 = vrcp.pop %v553
      %v908 = vmul.f32 %v553, %v907
      %v909 = vsub.f32 1.0, %v908
      %v910 = vmul.f32 %v907, %v909
      %v911 = vadd.f32 %v907, %v910
      %vm912 = vweird.f32 %v553
      %vm913 = vweird.f32 %v907
      %vm914 = vmor %vm912, %vm913
      %v915 = vsel %vm914, %v907, %v911
      %v916 = vand.u32 2147483647, %v553
      %vm917 = vcmp.eq.f32.partialorder %v916, 8.507059e+37
      %v918 = vand.u32 %v553, 2147483648
      %v919 = vor.u32 1.1754944e-38, %v918
      %v920 = vsel %vm917, %v919, %v915
      %v921 = vmul.f32 1.0, %v920
      %v922 = vrcp.pop %v554
      %v923 = vmul.f32 %v554, %v922
      %v924 = vsub.f32 1.0, %v923
      %v925 = vmul.f32 %v922, %v924
      %v926 = vadd.f32 %v922, %v925
      %vm927 = vweird.f32 %v554
      %vm928 = vweird.f32 %v922
      %vm929 = vmor %vm927, %vm928
      %v930 = vsel %vm929, %v922, %v926
      %v931 = vand.u32 2147483647, %v554
      %vm932 = vcmp.eq.f32.partialorder %v931, 8.507059e+37
      %v933 = vand.u32 %v554, 2147483648
      %v934 = vor.u32 1.1754944e-38, %v933
      %v935 = vsel %vm932, %v934, %v930
      %v936 = vmul.f32 1.0, %v935
      %v937 = vrcp.pop %v555
      %v938 = vmul.f32 %v555, %v937
      %v939 = vsub.f32 1.0, %v938
      %v940 = vmul.f32 %v937, %v939
      %v941 = vadd.f32 %v937, %v940
      %vm942 = vweird.f32 %v555
      %vm943 = vweird.f32 %v937
      %vm944 = vmor %vm942, %vm943
      %v945 = vsel %vm944, %v937, %v941
      %v946 = vand.u32 2147483647, %v555
      %vm947 = vcmp.eq.f32.partialorder %v946, 8.507059e+37
      %v948 = vand.u32 %v555, 2147483648
      %v949 = vor.u32 1.1754944e-38, %v948
      %v950 = vsel %vm947, %v949, %v945
      %v951 = vmul.f32 1.0, %v950
      %v952 = vrcp.pop %v556
      %v953 = vmul.f32 %v556, %v952
      %v954 = vsub.f32 1.0, %v953
      %v955 = vmul.f32 %v952, %v954
      %v956 = vadd.f32 %v952, %v955
      %vm957 = vweird.f32 %v556
      %vm958 = vweird.f32 %v952
      %vm959 = vmor %vm957, %vm958
      %v960 = vsel %vm959, %v952, %v956
      %v961 = vand.u32 2147483647, %v556
      %vm962 = vcmp.eq.f32.partialorder %v961, 8.507059e+37
      %v963 = vand.u32 %v556, 2147483648
      %v964 = vor.u32 1.1754944e-38, %v963
      %v965 = vsel %vm962, %v964, %v960
      %v966 = vmul.f32 1.0, %v965
      %v967 = vrcp.pop %v557
      %v968 = vmul.f32 %v557, %v967
      %v969 = vsub.f32 1.0, %v968
      %v970 = vmul.f32 %v967, %v969
      %v971 = vadd.f32 %v967, %v970
      %vm972 = vweird.f32 %v557
      %vm973 = vweird.f32 %v967
      %vm974 = vmor %vm972, %vm973
      %v975 = vsel %vm974, %v967, %v971
      %v976 = vand.u32 2147483647, %v557
      %vm977 = vcmp.eq.f32.partialorder %v976, 8.507059e+37
      %v978 = vand.u32 %v557, 2147483648
      %v979 = vor.u32 1.1754944e-38, %v978
      %v980 = vsel %vm977, %v979, %v975
      %v981 = vmul.f32 1.0, %v980
      %v982 = vrcp.pop %v558
      %v983 = vmul.f32 %v558, %v982
      %v984 = vsub.f32 1.0, %v983
      %v985 = vmul.f32 %v982, %v984
      %v986 = vadd.f32 %v982, %v985
      %vm987 = vweird.f32 %v558
      %vm988 = vweird.f32 %v982
      %vm989 = vmor %vm987, %vm988
      %v990 = vsel %vm989, %v982, %v986
      %v991 = vand.u32 2147483647, %v558
      %vm992 = vcmp.eq.f32.partialorder %v991, 8.507059e+37
      %v993 = vand.u32 %v558, 2147483648
      %v994 = vor.u32 1.1754944e-38, %v993
      %v995 = vsel %vm992, %v994, %v990
      %v996 = vmul.f32 1.0, %v995
      %v997 = vrcp.pop %v559
      %v998 = vmul.f32 %v559, %v997
      %v999 = vsub.f32 1.0, %v998
      %v1000 = vmul.f32 %v997, %v999
      %v1001 = vadd.f32 %v997, %v1000
      %vm1002 = vweird.f32 %v559
      %vm1003 = vweird.f32 %v997
      %vm1004 = vmor %vm1002, %vm1003
      %v1005 = vsel %vm1004, %v997, %v1001
      %v1006 = vand.u32 2147483647, %v559
      %vm1007 = vcmp.eq.f32.partialorder %v1006, 8.507059e+37
      %v1008 = vand.u32 %v559, 2147483648
      %v1009 = vor.u32 1.1754944e-38, %v1008
      %v1010 = vsel %vm1007, %v1009, %v1005
      %v1011 = vmul.f32 1.0, %v1010
      %v1012 = vrcp.pop %v560
      %v1013 = vmul.f32 %v560, %v1012
      %v1014 = vsub.f32 1.0, %v1013
      %v1015 = vmul.f32 %v1012, %v1014
      %v1016 = vadd.f32 %v1012, %v1015
      %vm1017 = vweird.f32 %v560
      %vm1018 = vweird.f32 %v1012
      %vm1019 = vmor %vm1017, %vm1018
      %v1020 = vsel %vm1019, %v1012, %v1016
      %v1021 = vand.u32 2147483647, %v560
      %vm1022 = vcmp.eq.f32.partialorder %v1021, 8.507059e+37
      %v1023 = vand.u32 %v560, 2147483648
      %v1024 = vor.u32 1.1754944e-38, %v1023
      %v1025 = vsel %vm1022, %v1024, %v1020
      %v1026 = vmul.f32 1.0, %v1025
      %v1027 = vrcp.pop %v561
      %v1028 = vmul.f32 %v561, %v1027
      %v1029 = vsub.f32 1.0, %v1028
      %v1030 = vmul.f32 %v1027, %v1029
      %v1031 = vadd.f32 %v1027, %v1030
      %vm1032 = vweird.f32 %v561
      %vm1033 = vweird.f32 %v1027
      %vm1034 = vmor %vm1032, %vm1033
      %v1035 = vsel %vm1034, %v1027, %v1031
      %v1036 = vand.u32 2147483647, %v561
      %vm1037 = vcmp.eq.f32.partialorder %v1036, 8.507059e+37
      %v1038 = vand.u32 %v561, 2147483648
      %v1039 = vor.u32 1.1754944e-38, %v1038
      %v1040 = vsel %vm1037, %v1039, %v1035
      %v1041 = vmul.f32 1.0, %v1040
      %v1042 = vmul.f32 %v355, %v576
      %v1043 = vmul.f32 %v357, %v591
      %v1044 = vmul.f32 %v360, %v606
      %v1045 = vmul.f32 %v362, %v621
      %v1046 = vmul.f32 %v365, %v636
      %v1047 = vmul.f32 %v367, %v651
      %v1048 = vmul.f32 %v370, %v666
      %v1049 = vmul.f32 %v372, %v681
      %v1050 = vmul.f32 %v375, %v696
      %v1051 = vmul.f32 %v377, %v711
      %v1052 = vmul.f32 %v380, %v726
      %v1053 = vmul.f32 %v382, %v741
      %v1054 = vmul.f32 %v385, %v756
      %v1055 = vmul.f32 %v387, %v771
      %v1056 = vmul.f32 %v390, %v786
      %v1057 = vmul.f32 %v392, %v801
      %v1058 = vmul.f32 %v395, %v816
      %v1059 = vmul.f32 %v397, %v831
      %v1060 = vmul.f32 %v400, %v846
      %v1061 = vmul.f32 %v402, %v861
      %v1062 = vmul.f32 %v405, %v876
      %v1063 = vmul.f32 %v407, %v891
      %v1064 = vmul.f32 %v410, %v906
      %v1065 = vmul.f32 %v412, %v921
      %v1066 = vmul.f32 %v415, %v936
      %v1067 = vmul.f32 %v417, %v951
      %v1068 = vmul.f32 %v420, %v966
      %v1069 = vmul.f32 %v422, %v981
      %v1070 = vmul.f32 %v425, %v996
      %v1071 = vmul.f32 %v427, %v1011
      %v1072 = vmul.f32 %v430, %v1026
      %v1073 = vmul.f32 %v432, %v1041
      %v1074 = vpack.c.bf16 %v1042, %v1042
      %v1075 = vpack.c.bf16 %v1043, %v1043
      %v1076 = vpack.c.bf16 %v1044, %v1044
      %v1077 = vpack.c.bf16 %v1045, %v1045
      %v1078 = vpack.c.bf16 %v1046, %v1046
      %v1079 = vpack.c.bf16 %v1047, %v1047
      %v1080 = vpack.c.bf16 %v1048, %v1048
      %v1081 = vpack.c.bf16 %v1049, %v1049
      %v1082 = vpack.c.bf16 %v1050, %v1050
      %v1083 = vpack.c.bf16 %v1051, %v1051
      %v1084 = vpack.c.bf16 %v1052, %v1052
      %v1085 = vpack.c.bf16 %v1053, %v1053
      %v1086 = vpack.c.bf16 %v1054, %v1054
      %v1087 = vpack.c.bf16 %v1055, %v1055
      %v1088 = vpack.c.bf16 %v1056, %v1056
      %v1089 = vpack.c.bf16 %v1057, %v1057
      %v1090 = vpack.c.bf16 %v1058, %v1058
      %v1091 = vpack.c.bf16 %v1059, %v1059
      %v1092 = vpack.c.bf16 %v1060, %v1060
      %v1093 = vpack.c.bf16 %v1061, %v1061
      %v1094 = vpack.c.bf16 %v1062, %v1062
      %v1095 = vpack.c.bf16 %v1063, %v1063
      %v1096 = vpack.c.bf16 %v1064, %v1064
      %v1097 = vpack.c.bf16 %v1065, %v1065
      %v1098 = vpack.c.bf16 %v1066, %v1066
      %v1099 = vpack.c.bf16 %v1067, %v1067
      %v1100 = vpack.c.bf16 %v1068, %v1068
      %v1101 = vpack.c.bf16 %v1069, %v1069
      %v1102 = vpack.c.bf16 %v1070, %v1070
      %v1103 = vpack.c.bf16 %v1071, %v1071
      %v1104 = vpack.c.bf16 %v1072, %v1072
      %v1105 = vpack.c.bf16 %v1073, %v1073
      %vm1106 = vcmask 11264
      %1107 = vst.msk [vmem:[%s172] sm:$0xf] %vm1106, %v1074
      %1108 = vst.msk [vmem:[%s172 + $0x4] sm:$0xf] %vm1106, %v1075
      %1109 = vst.msk [vmem:[%s172 + $0x8] sm:$0xf] %vm1106, %v1076
      %1110 = vst.msk [vmem:[%s172 + $0xc] sm:$0xf] %vm1106, %v1077
      %1111 = vst.msk [vmem:[%s172 + $0x10] sm:$0xf] %vm1106, %v1078
      %1112 = vst.msk [vmem:[%s172 + $0x14] sm:$0xf] %vm1106, %v1079
      %1113 = vst.msk [vmem:[%s172 + $0x18] sm:$0xf] %vm1106, %v1080
      %1114 = vst.msk [vmem:[%s172 + $0x1c] sm:$0xf] %vm1106, %v1081
      %1115 = vst.msk [vmem:[%s172 + $0x20] sm:$0xf] %vm1106, %v1082
      %1116 = vst.msk [vmem:[%s172 + $0x24] sm:$0xf] %vm1106, %v1083
      %1117 = vst.msk [vmem:[%s172 + $0x28] sm:$0xf] %vm1106, %v1084
      %1118 = vst.msk [vmem:[%s172 + $0x2c] sm:$0xf] %vm1106, %v1085
      %1119 = vst.msk [vmem:[%s172 + $0x30] sm:$0xf] %vm1106, %v1086
      %1120 = vst.msk [vmem:[%s172 + $0x34] sm:$0xf] %vm1106, %v1087
      %1121 = vst.msk [vmem:[%s172 + $0x38] sm:$0xf] %vm1106, %v1088
      %1122 = vst.msk [vmem:[%s172 + $0x3c] sm:$0xf] %vm1106, %v1089
      %1123 = vst.msk [vmem:[%s172 + $0x40] sm:$0xf] %vm1106, %v1090
      %1124 = vst.msk [vmem:[%s172 + $0x44] sm:$0xf] %vm1106, %v1091
      %1125 = vst.msk [vmem:[%s172 + $0x48] sm:$0xf] %vm1106, %v1092
      %1126 = vst.msk [vmem:[%s172 + $0x4c] sm:$0xf] %vm1106, %v1093
      %1127 = vst.msk [vmem:[%s172 + $0x50] sm:$0xf] %vm1106, %v1094
      %1128 = vst.msk [vmem:[%s172 + $0x54] sm:$0xf] %vm1106, %v1095
      %1129 = vst.msk [vmem:[%s172 + $0x58] sm:$0xf] %vm1106, %v1096
      %1130 = vst.msk [vmem:[%s172 + $0x5c] sm:$0xf] %vm1106, %v1097
      %1131 = vst.msk [vmem:[%s172 + $0x60] sm:$0xf] %vm1106, %v1098
      %1132 = vst.msk [vmem:[%s172 + $0x64] sm:$0xf] %vm1106, %v1099
      %1133 = vst.msk [vmem:[%s172 + $0x68] sm:$0xf] %vm1106, %v1100
      %1134 = vst.msk [vmem:[%s172 + $0x6c] sm:$0xf] %vm1106, %v1101
      %1135 = vst.msk [vmem:[%s172 + $0x70] sm:$0xf] %vm1106, %v1102
      %1136 = vst.msk [vmem:[%s172 + $0x74] sm:$0xf] %vm1106, %v1103
      %1137 = vst.msk [vmem:[%s172 + $0x78] sm:$0xf] %vm1106, %v1104
      %1138 = vst.msk [vmem:[%s172 + $0x7c] sm:$0xf] %vm1106, %v1105
      %s1139 = smul.u32 32, %s14
      %p1140 = scmp.lt.s32.totalorder %s1139, 63
      %s1141 = scalar_select %p1140, %s1139, 63
      %s1142 = smul.addr %s1141, 4
      %s1143 = scalar_lea.vmem %s3, %s1142
      // Predicated region
      $region33: #{tpu_custom_call.1} parent=31 // pred_check
        %p1144 = pneg %p100
      $region34: #{tpu_custom_call.1} parent=31 // pred_check_branch
        %1146 = sbr.rel (%p1144) target = $region36
      $region35: #{tpu_custom_call.1} parent=31 // pred_region
        %s1147 = smul.u32 32, %s14
      $region36: #{tpu_custom_call.1} parent=31 // pred_fallthru
        _
    $region32: #{tpu_custom_call.1} parent=5 // pred_fallthru
      _
    %p1148 = scmp.le.s32.totalorder 2, %s9
    // Predicated region
    $region37: #{tpu_custom_call.1} parent=5 // pred_check
      %p1149 = pneg %p1148
    $region38: #{tpu_custom_call.1} parent=5 // pred_check_branch
      %1151 = sbr.rel (%p1149) target = $region40
    $region39: #{tpu_custom_call.1} parent=5 // pred_region
      %s1152 = ssub.s32 %s9, 2
      // Predicated region
      $region41: #{tpu_custom_call.1} parent=39 // pred_check
        %p1153 = pneg %p106
      $region42: #{tpu_custom_call.1} parent=39 // pred_check_branch
        %1155 = sbr.rel (%p1153) target = $region44
      $region43: #{tpu_custom_call.1} parent=39 // pred_region
        %s1156 = smul.u32 32, %s15
        %p1157 = scmp.lt.s32.totalorder %s1156, 63
        %s1158 = scalar_select %p1157, %s1156, 63
        %s1159 = smul.addr %s1158, 4
        %s1160 = scalar_lea.vmem %s3, %s1159
      $region44: #{tpu_custom_call.1} parent=39 // pred_fallthru
        _
    $region40: #{tpu_custom_call.1} parent=5 // pred_fallthru
      _
  $region6: #{tpu_custom_call.1} parent=0 // loop_footer
    %s13 = sadd.s32 1, %s9
  $region7: #{tpu_custom_call.1} parent=0 // loop_footer_branch
    %8 = sbr.rel target = $region3
  $region8: #{tpu_custom_call.1} parent=0 // loop_exit
    _

</llo_original>
